<compile_context>
chip_gen: v7x
topology: tpu7x:2x2x1
jax: 0.10.0
libtpu: 0.0.40
codegen_flags: <defaults>
</compile_context>

<pallas_src>
import jax
import jax.numpy as jnp
from jax.experimental import pallas as pl
from jax.experimental.pallas import tpu as pltpu


def neighbor_kernel(u_k_ref, u_i_ref, adj_ref, w_ref, b_ref, out_ref, loss_ref):
    # u_k_ref : (1, TK, Fp)  u rows feeding the current contraction tile
    # u_i_ref : (1, TM, Fp)  u rows matching the current output-row tile (loss dot)
    # adj_ref : (1, TM, TK)  adjacency tile
    # w_ref   : (Fp, Fp) f32 GCN weight      b_ref: (1, Fp) f32 bias
    # out_ref : (1, TM, Fp) f32 GCN output tile (resident across k; doubles as accumulator)
    # loss_ref: (1, 1, TM)  lane-dense per-node loss tile
    k = pl.program_id(2)
    nk = pl.num_programs(2)

    @pl.when(k == 0)
    def _init():
        out_ref[0] = jnp.zeros_like(out_ref[0])

    adj = adj_ref[0]
    u_k = u_k_ref[0]
    if adj.dtype != u_k.dtype:
        # TODO(synk): on v7x feed both MXU operands as fp8 to hit the native fp8 path;
        # here the narrower adjacency is upcast so the kernel also lowers on v5e/v6e.
        adj = adj.astype(u_k.dtype)

    # Reassociated GCN: accumulate (adj @ u) over k; W is applied once in finalize.
    out_ref[0] += jnp.dot(adj, u_k, preferred_element_type=jnp.float32)

    @pl.when(k == nk - 1)
    def _finalize():
        acc = out_ref[0]                                      # (TM, Fp) f32 = (adj @ u)
        # Cheap once-per-tile FxF matmul, kept in f32 (W traffic is tiny, accuracy better).
        gcn_out = jnp.dot(acc, w_ref[...], preferred_element_type=jnp.float32) + b_ref[...]
        out_ref[0] = gcn_out

        # loss_i = -log(sigmoid(<out_i, u_i>)) == softplus(-dot), numerically stable.
        u_i = u_i_ref[0].astype(jnp.float32)                  # (TM, Fp)
        prod_t = jnp.transpose(gcn_out * u_i)                 # (Fp, TM) (XLU transpose)
        dot = jnp.sum(prod_t, axis=0, keepdims=True)          # (1, TM) lane-dense
        loss = jnp.maximum(-dot, 0.0) + jnp.log1p(jnp.exp(-jnp.abs(dot)))
        loss_ref[0] = loss.astype(loss_ref.dtype)             # unmasked lane-dense store


_TILE_BUDGET_BYTES = 40 << 20       # double-buffered working-set budget (fits v7x 64 MiB VMEM)
_DEFAULT_VMEM_LIMIT = 48 << 20      # explicit scoped-VMEM limit (>= v5e 16 MiB default, < v7x 64)


def _vmem_estimate(tm, tk, fp, adj_bytes, u_bytes):
    # Double-buffered pipeline working set in bytes.
    return 2 * (tm * tk * adj_bytes        # adjacency tile
                + tk * fp * u_bytes        # u_k (contraction rows)
                + tm * fp * u_bytes        # u_i (loss rows)
                + fp * fp * 4              # W (f32)
                + tm * fp * 4              # resident f32 output tile
                + tm * 4)                  # loss tile


def _pick_tiles(n, fp, adj_bytes, u_bytes):
    cands = [t for t in (1024, 512, 256, 128) if n % t == 0]
    if not cands:
        return n, n                        # small N: single full-extent tile
    for tm in cands:
        for tk in cands:
            if _vmem_estimate(tm, tk, fp, adj_bytes, u_bytes) <= _TILE_BUDGET_BYTES:
                return tm, tk
    return cands[-1], cands[-1]


def neighbor_predict(u_val, r_adj_mat, weight, bias, *,
                     compute_dtype=jnp.float32, adj_dtype=None,
                     tm=None, tk=None, vmem_limit_bytes=None, adj_buffers=None):
    """u_val: (B, N, F), r_adj_mat: (B, N, N), weight: (F, F), bias: (F,).

    Returns (output (B, N, F) f32, loss (B, N) f32), matching the batched PyTorch forward.
    compute_dtype: MXU / DMA dtype for u (and adj unless adj_dtype given). Use jnp.bfloat16
    on v6e/v7x for ~2x less HBM traffic on the dominant adjacency stream.
    adj_dtype: optional separate dtype for the adjacency (e.g. jnp.float8_e4m3fn on v7x).
    """
    B, N, F = u_val.shape
    assert r_adj_mat.shape == (B, N, N)
    assert weight.shape == (F, F)
    assert bias.shape == (F,)

    # Pad the feature dim to a multiple of 128 lanes (MXU / vreg efficiency). The extra u
    # columns are zero, so the GCN output pad columns are zero and the loss dot is unchanged.
    Fp = F if F % 128 == 0 else ((F + 127) // 128) * 128
    if Fp != F:
        u_pad = jnp.pad(u_val, ((0, 0), (0, 0), (0, Fp - F)))
        w_pad = jnp.pad(weight, ((0, Fp - F), (0, Fp - F)))
        b_pad = jnp.pad(bias, ((0, Fp - F),))
    else:
        u_pad, w_pad, b_pad = u_val, weight, bias

    # Cast low-precision operands in HBM (wrapper-side) so the DMA bytes actually shrink.
    adj_dtype = compute_dtype if adj_dtype is None else adj_dtype
    u_in = u_pad.astype(compute_dtype)
    adj_in = r_adj_mat.astype(adj_dtype)
    w_in = w_pad.astype(jnp.float32)
    b_in = b_pad.reshape(1, Fp).astype(jnp.float32)

    adj_bytes = jnp.dtype(adj_dtype).itemsize
    u_bytes = jnp.dtype(compute_dtype).itemsize
    if tm is None or tk is None:
        tm_auto, tk_auto = _pick_tiles(N, Fp, adj_bytes, u_bytes)
        tm = tm_auto if tm is None else tm
        tk = tk_auto if tk is None else tk
    assert N % tm == 0 and N % tk == 0

    if vmem_limit_bytes is None:
        vmem_limit_bytes = _DEFAULT_VMEM_LIMIT

    adj_spec_kwargs = {}
    if adj_buffers is not None:
        adj_spec_kwargs["pipeline_mode"] = pl.Buffered(adj_buffers)

    out_p, loss3 = pl.pallas_call(
        neighbor_kernel,
        out_shape=(
            jax.ShapeDtypeStruct((B, N, Fp), jnp.float32),   # GCN output (padded features)
            jax.ShapeDtypeStruct((B, 1, N), jnp.float32),    # lane-dense per-node loss
        ),
        grid=(B, N // tm, N // tk),
        in_specs=[
            pl.BlockSpec((1, tk, Fp), lambda b, i, k: (b, k, 0)),   # u rows for K-tile
            pl.BlockSpec((1, tm, Fp), lambda b, i, k: (b, i, 0)),   # u rows for loss dot
            pl.BlockSpec((1, tm, tk), lambda b, i, k: (b, i, k),    # adjacency tile
                         **adj_spec_kwargs),
            pl.BlockSpec((Fp, Fp), lambda b, i, k: (0, 0)),         # W
            pl.BlockSpec((1, Fp), lambda b, i, k: (0, 0)),          # bias
        ],
        out_specs=(
            pl.BlockSpec((1, tm, Fp), lambda b, i, k: (b, i, 0)),   # output tile (acc over k)
            pl.BlockSpec((1, 1, tm), lambda b, i, k: (b, 0, i)),    # lane-dense loss tile
        ),
        compiler_params=pltpu.CompilerParams(
            dimension_semantics=("parallel", "parallel", "arbitrary"),
            vmem_limit_bytes=vmem_limit_bytes,
        ),
    )(u_in, u_in, adj_in, w_in, b_in)

    out = out_p[..., :F] if Fp != F else out_p
    return out, loss3[:, 0, :]


def reference(u_val, r_adj_mat, weight, bias):
    support = jnp.einsum('bnf,fg->bng', u_val, weight)
    out = jnp.einsum('bnm,bmg->bng', r_adj_mat, support) + bias
    dot = jnp.sum(out * u_val, axis=-1)
    loss = -jnp.log(jax.nn.sigmoid(dot))
    return out, loss


if __name__ == "__main__":
    B, N, F = 2, 16, 32   # batch, num_nodes, num_features (toy sizes)

    key = jax.random.PRNGKey(0)
    k_u, k_adj, k_w, k_b = jax.random.split(key, 4)

    u_val = jax.random.normal(k_u, (B, N, F), dtype=jnp.float32)
    # symmetric-ish, row-normalized adjacency
    a = jax.random.uniform(k_adj, (B, N, N), dtype=jnp.float32)
    r_adj = (a + jnp.swapaxes(a, 1, 2)) * 0.5
    r_adj = r_adj / jnp.sum(r_adj, axis=-1, keepdims=True)

    # GConv(num_features, num_features) parameters, deterministic init
    bound = 1.0 / jnp.sqrt(F)
    weight = jax.random.uniform(k_w, (F, F), minval=-bound, maxval=bound, dtype=jnp.float32)
    bias = jax.random.uniform(k_b, (F,), minval=-bound, maxval=bound, dtype=jnp.float32)

    ref_out, ref_loss = reference(u_val, r_adj, weight, bias)

    # f32 path (reassociated (adj@u)@W; tolerance-level match vs. the reference einsum order)
    out, loss = neighbor_predict(u_val, r_adj, weight, bias, compute_dtype=jnp.float32)
    jax.block_until_ready((out, loss))
    assert out.shape == (B, N, F) and loss.shape == (B, N)
    assert jnp.allclose(out, ref_out, atol=1e-4, rtol=1e-4)
    assert jnp.allclose(loss, ref_loss, atol=1e-4, rtol=1e-4)

    # bf16 HBM/MXU operands, f32 accumulation (fast path on v6e/v7x: halves adj DMA bytes)
    out_bf, loss_bf = neighbor_predict(u_val, r_adj, weight, bias, compute_dtype=jnp.bfloat16)
    jax.block_until_ready((out_bf, loss_bf))
    assert jnp.allclose(out_bf, ref_out, atol=5e-2, rtol=5e-2)
    assert jnp.allclose(loss_bf, ref_loss, atol=5e-2, rtol=5e-2)

    print("KERNEL_OK")
</pallas_src>

<mosaic_0001>
module attributes {stable_mosaic.version = 11 : i64} {
  func.func @neighbor_kernel(%arg0: i32, %arg1: i32, %arg2: i32, %arg3: memref<1x16x128xf32, #tpu.memory_space<vmem>>, %arg4: memref<1x16x128xf32, #tpu.memory_space<vmem>>, %arg5: memref<1x16x16xf32, #tpu.memory_space<vmem>>, %arg6: memref<128x128xf32, #tpu.memory_space<vmem>>, %arg7: memref<1x128xf32, #tpu.memory_space<vmem>>, %arg8: memref<1x16x128xf32, #tpu.memory_space<vmem>>, %arg9: memref<1x1x16xf32, #tpu.memory_space<vmem>>) attributes {dimension_semantics = [#tpu.dimension_semantics<parallel>, #tpu.dimension_semantics<parallel>, #tpu.dimension_semantics<arbitrary>], iteration_bounds = array<i64: 2, 1, 1>, scalar_prefetch = 0 : i64, scratch_operands = 0 : i64, tpu.core_type = #tpu.core_type<tc>, window_params = [{transform_indices = @transform_0, window_bounds = array<i64: 1, 16, 128>}, {transform_indices = @transform_1, window_bounds = array<i64: 1, 16, 128>}, {transform_indices = @transform_2, window_bounds = array<i64: 1, 16, 16>}, {pipeline_mode = #tpu.pipeline_mode<synchronous>, transform_indices = @transform_3, window_bounds = array<i64: 128, 128>}, {pipeline_mode = #tpu.pipeline_mode<synchronous>, transform_indices = @transform_4, window_bounds = array<i64: 1, 128>}, {transform_indices = @transform_5, window_bounds = array<i64: 1, 16, 128>}, {transform_indices = @transform_6, window_bounds = array<i64: 1, 1, 16>}]} {
    %c0_i32 = arith.constant 0 : i32
    %0 = arith.cmpi eq, %arg2, %c0_i32 : i32
    %1 = arith.extui %0 : i1 to i32
    %c0_i32_0 = arith.constant 0 : i32
    %2 = arith.cmpi ne, %1, %c0_i32_0 : i32
    scf.if %2 {
      %cst_14 = arith.constant 0.000000e+00 : f32
      %17 = vector.broadcast %cst_14 : f32 to vector<16x128xf32>
      %c0_15 = arith.constant 0 : index
      %c0_16 = arith.constant 0 : index
      %c0_17 = arith.constant 0 : index
      %18 = vector.load %arg8[%c0_15, %c0_16, %c0_17] : memref<1x16x128xf32, #tpu.memory_space<vmem>>, vector<1x16x128xf32>
      %19 = vector.shape_cast %18 : vector<1x16x128xf32> to vector<16x128xf32>
      %20 = vector.shape_cast %17 : vector<16x128xf32> to vector<1x16x128xf32>
      tpu.vector_store %arg8[%c0_15, %c0_16, %c0_17], %20 {strides = array<i32>} : memref<1x16x128xf32, #tpu.memory_space<vmem>>, vector<1x16x128xf32>,
    } else {
    }
    %c0 = arith.constant 0 : index
    %c0_1 = arith.constant 0 : index
    %c0_2 = arith.constant 0 : index
    %3 = vector.load %arg5[%c0, %c0_1, %c0_2] : memref<1x16x16xf32, #tpu.memory_space<vmem>>, vector<1x16x16xf32>
    %4 = vector.shape_cast %3 : vector<1x16x16xf32> to vector<16x16xf32>
    %c0_3 = arith.constant 0 : index
    %c0_4 = arith.constant 0 : index
    %c0_5 = arith.constant 0 : index
    %5 = vector.load %arg3[%c0_3, %c0_4, %c0_5] : memref<1x16x128xf32, #tpu.memory_space<vmem>>, vector<1x16x128xf32>
    %6 = vector.shape_cast %5 : vector<1x16x128xf32> to vector<16x128xf32>
    %c0_6 = arith.constant 0 : index
    %c0_7 = arith.constant 0 : index
    %c0_8 = arith.constant 0 : index
    %7 = vector.load %arg8[%c0_6, %c0_7, %c0_8] : memref<1x16x128xf32, #tpu.memory_space<vmem>>, vector<1x16x128xf32>
    %8 = vector.shape_cast %7 : vector<1x16x128xf32> to vector<16x128xf32>
    %cst = arith.constant dense<0.000000e+00> : vector<16x128xf32>
    %9 = tpu.matmul %4, %6, %cst {dimension_numbers = #tpu.dot_dimension_numbers<[1], [0], [0], [1], [0, 0, 1, 1], [], []>} : vector<16x16xf32>, vector<16x128xf32>, vector<16x128xf32> -> vector<16x128xf32>
    %10 = arith.addf %8, %9 : vector<16x128xf32>
    %c0_9 = arith.constant 0 : index
    %c0_10 = arith.constant 0 : index
    %c0_11 = arith.constant 0 : index
    %11 = vector.load %arg8[%c0_9, %c0_10, %c0_11] : memref<1x16x128xf32, #tpu.memory_space<vmem>>, vector<1x16x128xf32>
    %12 = vector.shape_cast %11 : vector<1x16x128xf32> to vector<16x128xf32>
    %13 = vector.shape_cast %10 : vector<16x128xf32> to vector<1x16x128xf32>
    tpu.vector_store %arg8[%c0_9, %c0_10, %c0_11], %13 {strides = array<i32>} : memref<1x16x128xf32, #tpu.memory_space<vmem>>, vector<1x16x128xf32>,
    %c0_i32_12 = arith.constant 0 : i32
    %14 = arith.cmpi eq, %arg2, %c0_i32_12 : i32
    %15 = arith.extui %14 : i1 to i32
    %c0_i32_13 = arith.constant 0 : i32
    %16 = arith.cmpi ne, %15, %c0_i32_13 : i32
    scf.if %16 {
      %c0_14 = arith.constant 0 : index
      %c0_15 = arith.constant 0 : index
      %c0_16 = arith.constant 0 : index
      %17 = vector.load %arg8[%c0_14, %c0_15, %c0_16] : memref<1x16x128xf32, #tpu.memory_space<vmem>>, vector<1x16x128xf32>
      %18 = vector.shape_cast %17 : vector<1x16x128xf32> to vector<16x128xf32>
      %c0_17 = arith.constant 0 : index
      %c0_18 = arith.constant 0 : index
      %19 = vector.load %arg6[%c0_17, %c0_18] : memref<128x128xf32, #tpu.memory_space<vmem>>, vector<128x128xf32>
      %cst_19 = arith.constant dense<0.000000e+00> : vector<16x128xf32>
      %20 = tpu.matmul %18, %19, %cst_19 {dimension_numbers = #tpu.dot_dimension_numbers<[1], [0], [0], [1], [0, 0, 1, 1], [], []>} : vector<16x128xf32>, vector<128x128xf32>, vector<16x128xf32> -> vector<16x128xf32>
      %c0_20 = arith.constant 0 : index
      %c0_21 = arith.constant 0 : index
      %21 = vector.load %arg7[%c0_20, %c0_21] : memref<1x128xf32, #tpu.memory_space<vmem>>, vector<1x128xf32>
      %22 = vector.broadcast %21 : vector<1x128xf32> to vector<16x128xf32>
      %23 = arith.addf %20, %22 : vector<16x128xf32>
      %c0_22 = arith.constant 0 : index
      %c0_23 = arith.constant 0 : index
      %c0_24 = arith.constant 0 : index
      %24 = vector.load %arg8[%c0_22, %c0_23, %c0_24] : memref<1x16x128xf32, #tpu.memory_space<vmem>>, vector<1x16x128xf32>
      %25 = vector.shape_cast %24 : vector<1x16x128xf32> to vector<16x128xf32>
      %26 = vector.shape_cast %23 : vector<16x128xf32> to vector<1x16x128xf32>
      tpu.vector_store %arg8[%c0_22, %c0_23, %c0_24], %26 {strides = array<i32>} : memref<1x16x128xf32, #tpu.memory_space<vmem>>, vector<1x16x128xf32>,
      %c0_25 = arith.constant 0 : index
      %c0_26 = arith.constant 0 : index
      %c0_27 = arith.constant 0 : index
      %27 = vector.load %arg4[%c0_25, %c0_26, %c0_27] : memref<1x16x128xf32, #tpu.memory_space<vmem>>, vector<1x16x128xf32>
      %28 = vector.shape_cast %27 : vector<1x16x128xf32> to vector<16x128xf32>
      %29 = arith.mulf %23, %28 : vector<16x128xf32>
      %30 = tpu.transpose %29, [1, 0] : vector<16x128xf32> -> vector<128x16xf32>
      %cst_28 = arith.constant dense<0.000000e+00> : vector<16xf32>
      %31 = vector.multi_reduction <add>, %30, %cst_28 [0] : vector<128x16xf32> to vector<16xf32>
      %32 = vector.shape_cast %31 : vector<16xf32> to vector<1x16xf32>
      %cst_29 = arith.constant 0.000000e+00 : f32
      %33 = vector.broadcast %cst_29 : f32 to vector<1x16xf32>
      %34 = arith.subf %33, %32 : vector<1x16xf32>
      %cst_30 = arith.constant 0.000000e+00 : f32
      %35 = vector.broadcast %cst_30 : f32 to vector<1x16xf32>
      %36 = arith.maximumf %34, %35 : vector<1x16xf32>
      %37 = math.absf %32 : vector<1x16xf32>
      %cst_31 = arith.constant 0.000000e+00 : f32
      %38 = vector.broadcast %cst_31 : f32 to vector<1x16xf32>
      %39 = arith.subf %38, %37 : vector<1x16xf32>
      %40 = math.exp %39 : vector<1x16xf32>
      %41 = math.log1p %40 : vector<1x16xf32>
      %42 = arith.addf %36, %41 : vector<1x16xf32>
      %c0_32 = arith.constant 0 : index
      %c0_33 = arith.constant 0 : index
      %c0_34 = arith.constant 0 : index
      %43 = vector.load %arg9[%c0_32, %c0_33, %c0_34] : memref<1x1x16xf32, #tpu.memory_space<vmem>>, vector<1x1x16xf32>
      %44 = vector.shape_cast %43 : vector<1x1x16xf32> to vector<1x16xf32>
      %45 = vector.shape_cast %42 : vector<1x16xf32> to vector<1x1x16xf32>
      tpu.vector_store %arg9[%c0_32, %c0_33, %c0_34], %45 {strides = array<i32>} : memref<1x1x16xf32, #tpu.memory_space<vmem>>, vector<1x1x16xf32>,
    } else {
    }
    return
  }
  func.func @transform_0(%arg0: i32, %arg1: i32, %arg2: i32) -> (i32, i32, i32) {
    %c0_i32 = arith.constant 0 : i32
    %c0_i32_0 = arith.constant 0 : i32
    return %arg0, %arg2, %c0_i32 : i32, i32, i32
  }
  func.func @transform_1(%arg0: i32, %arg1: i32, %arg2: i32) -> (i32, i32, i32) {
    %c0_i32 = arith.constant 0 : i32
    %c0_i32_0 = arith.constant 0 : i32
    return %arg0, %arg1, %c0_i32 : i32, i32, i32
  }
  func.func @transform_2(%arg0: i32, %arg1: i32, %arg2: i32) -> (i32, i32, i32) {
    %c0_i32 = arith.constant 0 : i32
    return %arg0, %arg1, %arg2 : i32, i32, i32
  }
  func.func @transform_3(%arg0: i32, %arg1: i32, %arg2: i32) -> (i32, i32) {
    %c0_i32 = arith.constant 0 : i32
    %c0_i32_0 = arith.constant 0 : i32
    %c0_i32_1 = arith.constant 0 : i32
    return %c0_i32, %c0_i32_0 : i32, i32
  }
  func.func @transform_4(%arg0: i32, %arg1: i32, %arg2: i32) -> (i32, i32) {
    %c0_i32 = arith.constant 0 : i32
    %c0_i32_0 = arith.constant 0 : i32
    %c0_i32_1 = arith.constant 0 : i32
    return %c0_i32, %c0_i32_0 : i32, i32
  }
  func.func @transform_5(%arg0: i32, %arg1: i32, %arg2: i32) -> (i32, i32, i32) {
    %c0_i32 = arith.constant 0 : i32
    %c0_i32_0 = arith.constant 0 : i32
    return %arg0, %arg1, %c0_i32 : i32, i32, i32
  }
  func.func @transform_6(%arg0: i32, %arg1: i32, %arg2: i32) -> (i32, i32, i32) {
    %c0_i32 = arith.constant 0 : i32
    %c0_i32_0 = arith.constant 0 : i32
    return %arg0, %c0_i32, %arg1 : i32, i32, i32
  }
}

</mosaic_0001>

<llo_original>
// kernel: tpu_custom_call.1
$region0: #{tpu_custom_call.1}
  #allocation0 [shape = 'u32[]', space=smem, size = 0x4, offset = 0x4, fixed_abs, tag = 'smem constant byte address 0x4 - core index']
  #allocation1 [shape = 'u32[144,128]{1,0:T(1,128)}', space=vmem, size = 0x12000, scoped, tag = 'internal scratch']
  %s0 = inlined_call_operand.hbm [shape: f32[2,16,128], index: 0, kind: input, shape index: {}]
  %s1 = inlined_call_operand.hbm [shape: f32[2,16,128], index: 1, kind: input, shape index: {}]
  %s2 = inlined_call_operand.hbm [shape: f32[2,16,16], index: 2, kind: input, shape index: {}]
  %s3 = inlined_call_operand.hbm [shape: f32[128,128], index: 3, kind: input, shape index: {}]
  %s4 = inlined_call_operand.vmem [shape: f32[1,128], index: 4, kind: input, shape index: {}]
  %s5 = inlined_call_operand.hbm [shape: f32[2,16,128], index: 5, kind: output, shape index: {0}]
  %s6 = inlined_call_operand.hbm [shape: f32[2,1,16], index: 6, kind: output, shape index: {1}]
  %7 = xla_tuple %s5, %s6
  %s8 = sld [smem:[#allocation0]]
  $region85: #{tpu_custom_call.1} parent=0
    _
  %s10 = ssub.s32 1, %s8
  %s11 = scalar_select 0, %s10, %s8
  $region1: #{tpu_custom_call.1} parent=0
    #allocation2 [shape = 'u8[16384]{0}', space=vmem, size = 0x4000, scoped, tag = 'input window, operand 0']
    #allocation3 [shape = 's32[2]{0}', space=sflag, size = 0x8, scoped, tag = 'scoped memory for tpu_custom_call.1']
    #allocation4 [shape = 's32[2]{0}', space=sflag, size = 0x8, scoped, tag = 'scoped memory for tpu_custom_call.1']
    #allocation5 [shape = 'u8[16384]{0}', space=vmem, size = 0x4000, scoped, tag = 'input window, operand 1']
    #allocation6 [shape = 's32[2]{0}', space=sflag, size = 0x8, scoped, tag = 'scoped memory for tpu_custom_call.1']
    #allocation7 [shape = 'u8[16384]{0}', space=vmem, size = 0x4000, scoped, tag = 'input window, operand 2']
    #allocation8 [shape = 'u8[65536]{0}', space=vmem, size = 0x10000, scoped, tag = 'input window, operand 3, single buffered']
    #allocation9 [shape = 's32[1]{0}', space=sflag, size = 0x4, scoped, tag = 'scoped memory for tpu_custom_call.1']
    #allocation10 [shape = 'u8[16384]{0}', space=vmem, size = 0x4000, scoped, tag = 'output window, operand 0']
    #allocation11 [shape = 'u8[1024]{0}', space=vmem, size = 0x400, scoped, tag = 'output window, operand 1']
    #allocation12 [shape = 's32[2]{0}', space=sflag, size = 0x8, scoped, tag = 'scoped memory for tpu_custom_call.1']
    %12 = vsyncpa [#allocation3], 0
    %s13 = scalar_lea.sflag [#allocation3], 1
    %14 = vsyncpa %s13, 0
    %15 = vsyncpa [#allocation6], 0
    %s16 = scalar_lea.sflag [#allocation6], 1
    %17 = vsyncpa %s16, 0
    %18 = vsyncpa [#allocation9], 0
    %19 = vsyncpa [#allocation4], 0
    %s20 = scalar_lea.sflag [#allocation4], 1
    %21 = vsyncpa %s20, 0
    %22 = vsyncpa [#allocation12], 0
    %s23 = scalar_lea.sflag [#allocation12], 1
    %24 = vsyncpa %s23, 0
    loop: start=0, step=1, limit=4
    $region2: #{tpu_custom_call.1} parent=1 // loop_pre_header
      _
    $region3: #{tpu_custom_call.1} parent=1 // loop_header
      %s26 = sphi 0, %s30
      %p27 = scmp.ge.s32.totalorder %s26, 4
      %s33 = sphi 0, %s52
      %s34 = sphi 0, %s48
      %s35 = sphi 0, %s44
      %s36 = sphi 0, %s33
      %s37 = sphi 0, %s34
      %s38 = sphi 0, %s35
      %s39 = sphi 0, %s36
      %s40 = sphi 0, %s37
      %s41 = sphi 0, %s38
      %s57 = sphi 0, %s59
      %s60 = sphi 0, %s57
      %s61 = sphi 0, %s60
      %s77 = sphi 0, %s61
      %s85 = sphi 0, %s87
      %s88 = sphi 0, %s85
      %s89 = sphi 0, %s88
      %s105 = sphi 0, %s89
      %s115 = sphi 0, %s117
      %s118 = sphi 0, %s115
      %s119 = sphi 0, %s118
      %s135 = sphi 0, %s119
      %s139 = sphi 0, %s139
      %s141 = sphi 0, %s139
      %s142 = sphi 0, %s141
      %s156 = sphi 0, %s142
      %s160 = sphi 0, %s160
      %s162 = sphi 0, %s160
      %s163 = sphi 0, %s162
      %s177 = sphi 0, %s163
      %s185 = sphi 0, %s187
      %s188 = sphi 0, %s185
      %s189 = sphi 0, %s188
      %s205 = sphi 0, %s189
      %s213 = sphi 0, %s215
      %s216 = sphi 0, %s213
      %s217 = sphi 0, %s216
      %s233 = sphi 0, %s217
    $region4: #{tpu_custom_call.1} parent=1 // loop_header_branch
      %29 = sbr.rel (%p27) target = $region8
    $region5: #{tpu_custom_call.1} parent=1 // loop_body
      %s31 = ssub.s32 %s26, 1
      %s32 = ssub.s32 %s26, 2
      %s42 = sadd.s32 1, %s35
      %p43 = scmp.ge.s32.totalorder %s42, 1
      %s44 = scalar_select %p43, 0, %s42
      %s45 = sadd.s32 1, %s34
      %s46 = scalar_select %p43, %s45, %s34
      %p47 = scmp.ge.s32.totalorder %s46, 1
      %s48 = scalar_select %p47, 0, %s46
      %s49 = sadd.s32 1, %s33
      %s50 = scalar_select %p47, %s49, %s33
      %p51 = scmp.ge.s32.totalorder %s50, 2
      %s52 = scalar_select %p51, 0, %s50
      %s53 = ssub.s32 %s33, %s52
      %s54 = ssub.s32 %s35, %s44
      %s55 = sor.u32 %s53, %s54
      %p56 = scmp.eq.s32.totalorder %s55, 0
      %s58 = sadd.s32 %s57, 1
      %s59 = scalar_select %p56, %s57, %s58
      %p62 = pneg %p56
      %p63 = scmp.eq.s32.totalorder %s26, 1
      %p64 = por %p62, %p63
      %p65 = scmp.ne.s32.totalorder %s57, %s60
      %p66 = scmp.eq.s32.totalorder %s26, 0
      %p67 = por %p65, %p66
      %p68 = scmp.ne.s32.totalorder %s57, %s60
      %p69 = scmp.eq.s32.totalorder %s31, 1
      %p70 = por %p68, %p69
      %p71 = scmp.ne.s32.totalorder %s60, %s61
      %p72 = scmp.eq.s32.totalorder %s31, 0
      %p73 = por %p71, %p72
      %p74 = scmp.ne.s32.totalorder %s60, %s61
      %p75 = scmp.eq.s32.totalorder %s32, 1
      %p76 = por %p74, %p75
      %p78 = scmp.ne.s32.totalorder %s61, %s77
      %p79 = scmp.eq.s32.totalorder %s32, 0
      %p80 = por %p78, %p79
      %s81 = ssub.s32 %s33, %s52
      %s82 = ssub.s32 %s34, %s48
      %s83 = sor.u32 %s81, %s82
      %p84 = scmp.eq.s32.totalorder %s83, 0
      %s86 = sadd.s32 %s85, 1
      %s87 = scalar_select %p84, %s85, %s86
      %p90 = pneg %p84
      %p91 = scmp.eq.s32.totalorder %s26, 1
      %p92 = por %p90, %p91
      %p93 = scmp.ne.s32.totalorder %s85, %s88
      %p94 = scmp.eq.s32.totalorder %s26, 0
      %p95 = por %p93, %p94
      %p96 = scmp.ne.s32.totalorder %s85, %s88
      %p97 = scmp.eq.s32.totalorder %s31, 1
      %p98 = por %p96, %p97
      %p99 = scmp.ne.s32.totalorder %s88, %s89
      %p100 = scmp.eq.s32.totalorder %s31, 0
      %p101 = por %p99, %p100
      %p102 = scmp.ne.s32.totalorder %s88, %s89
      %p103 = scmp.eq.s32.totalorder %s32, 1
      %p104 = por %p102, %p103
      %p106 = scmp.ne.s32.totalorder %s89, %s105
      %p107 = scmp.eq.s32.totalorder %s32, 0
      %p108 = por %p106, %p107
      %s109 = ssub.s32 %s33, %s52
      %s110 = ssub.s32 %s34, %s48
      %s111 = sor.u32 %s109, %s110
      %s112 = ssub.s32 %s35, %s44
      %s113 = sor.u32 %s111, %s112
      %p114 = scmp.eq.s32.totalorder %s113, 0
      %s116 = sadd.s32 %s115, 1
      %s117 = scalar_select %p114, %s115, %s116
      %p120 = pneg %p114
      %p121 = scmp.eq.s32.totalorder %s26, 1
      %p122 = por %p120, %p121
      %p123 = scmp.ne.s32.totalorder %s115, %s118
      %p124 = scmp.eq.s32.totalorder %s26, 0
      %p125 = por %p123, %p124
      %p126 = scmp.ne.s32.totalorder %s115, %s118
      %p127 = scmp.eq.s32.totalorder %s31, 1
      %p128 = por %p126, %p127
      %p129 = scmp.ne.s32.totalorder %s118, %s119
      %p130 = scmp.eq.s32.totalorder %s31, 0
      %p131 = por %p129, %p130
      %p132 = scmp.ne.s32.totalorder %s118, %s119
      %p133 = scmp.eq.s32.totalorder %s32, 1
      %p134 = por %p132, %p133
      %p136 = scmp.ne.s32.totalorder %s119, %s135
      %p137 = scmp.eq.s32.totalorder %s32, 0
      %p138 = por %p136, %p137
      %s140 = sadd.s32 %s139, 1
      %p143 = scmp.eq.s32.totalorder %s26, 1
      %p144 = scmp.ne.s32.totalorder %s139, %s141
      %p145 = scmp.eq.s32.totalorder %s26, 0
      %p146 = por %p144, %p145
      %p147 = scmp.ne.s32.totalorder %s139, %s141
      %p148 = scmp.eq.s32.totalorder %s31, 1
      %p149 = por %p147, %p148
      %p150 = scmp.ne.s32.totalorder %s141, %s142
      %p151 = scmp.eq.s32.totalorder %s31, 0
      %p152 = por %p150, %p151
      %p153 = scmp.ne.s32.totalorder %s141, %s142
      %p154 = scmp.eq.s32.totalorder %s32, 1
      %p155 = por %p153, %p154
      %p157 = scmp.ne.s32.totalorder %s142, %s156
      %p158 = scmp.eq.s32.totalorder %s32, 0
      %p159 = por %p157, %p158
      %s161 = sadd.s32 %s160, 1
      %p164 = scmp.eq.s32.totalorder %s26, 1
      %p165 = scmp.ne.s32.totalorder %s160, %s162
      %p166 = scmp.eq.s32.totalorder %s26, 0
      %p167 = por %p165, %p166
      %p168 = scmp.ne.s32.totalorder %s160, %s162
      %p169 = scmp.eq.s32.totalorder %s31, 1
      %p170 = por %p168, %p169
      %p171 = scmp.ne.s32.totalorder %s162, %s163
      %p172 = scmp.eq.s32.totalorder %s31, 0
      %p173 = por %p171, %p172
      %p174 = scmp.ne.s32.totalorder %s162, %s163
      %p175 = scmp.eq.s32.totalorder %s32, 1
      %p176 = por %p174, %p175
      %p178 = scmp.ne.s32.totalorder %s163, %s177
      %p179 = scmp.eq.s32.totalorder %s32, 0
      %p180 = por %p178, %p179
      %s181 = ssub.s32 %s33, %s52
      %s182 = ssub.s32 %s34, %s48
      %s183 = sor.u32 %s181, %s182
      %p184 = scmp.eq.s32.totalorder %s183, 0
      %s186 = sadd.s32 %s185, 1
      %s187 = scalar_select %p184, %s185, %s186
      %p190 = pneg %p184
      %p191 = scmp.eq.s32.totalorder %s26, 1
      %p192 = por %p190, %p191
      %p193 = scmp.ne.s32.totalorder %s185, %s188
      %p194 = scmp.eq.s32.totalorder %s26, 0
      %p195 = por %p193, %p194
      %p196 = scmp.ne.s32.totalorder %s185, %s188
      %p197 = scmp.eq.s32.totalorder %s31, 1
      %p198 = por %p196, %p197
      %p199 = scmp.ne.s32.totalorder %s188, %s189
      %p200 = scmp.eq.s32.totalorder %s31, 0
      %p201 = por %p199, %p200
      %p202 = scmp.ne.s32.totalorder %s188, %s189
      %p203 = scmp.eq.s32.totalorder %s32, 1
      %p204 = por %p202, %p203
      %p206 = scmp.ne.s32.totalorder %s189, %s205
      %p207 = scmp.eq.s32.totalorder %s32, 0
      %p208 = por %p206, %p207
      %s209 = ssub.s32 %s33, %s52
      %s210 = ssub.s32 %s34, %s48
      %s211 = sor.u32 %s209, %s210
      %p212 = scmp.eq.s32.totalorder %s211, 0
      %s214 = sadd.s32 %s213, 1
      %s215 = scalar_select %p212, %s213, %s214
      %p218 = pneg %p212
      %p219 = scmp.eq.s32.totalorder %s26, 1
      %p220 = por %p218, %p219
      %p221 = scmp.ne.s32.totalorder %s213, %s216
      %p222 = scmp.eq.s32.totalorder %s26, 0
      %p223 = por %p221, %p222
      %p224 = scmp.ne.s32.totalorder %s213, %s216
      %p225 = scmp.eq.s32.totalorder %s31, 1
      %p226 = por %p224, %p225
      %p227 = scmp.ne.s32.totalorder %s216, %s217
      %p228 = scmp.eq.s32.totalorder %s31, 0
      %p229 = por %p227, %p228
      %p230 = scmp.ne.s32.totalorder %s216, %s217
      %p231 = scmp.eq.s32.totalorder %s32, 1
      %p232 = por %p230, %p231
      %p234 = scmp.ne.s32.totalorder %s217, %s233
      %p235 = scmp.eq.s32.totalorder %s32, 0
      %p236 = por %p234, %p235
      %p237 = scmp.le.s32.totalorder 1, %s26
      %p238 = scmp.lt.s32.totalorder %s26, 3
      %p239 = pnand %p237, %p238
      %p240 = pneg %p239
      // Predicated region
      $region9: #{tpu_custom_call.1} parent=5 // pred_check
        _
      $region10: #{tpu_custom_call.1} parent=5 // pred_check_branch
        %242 = sbr.rel (%p239) target = $region12
      $region11: #{tpu_custom_call.1} parent=5 // pred_region
        %s243 = ssub.s32 %s26, 1
        // Predicated region
        $region13: #{tpu_custom_call.1} parent=11 // pred_check
          %p244 = pneg %p152
        $region14: #{tpu_custom_call.1} parent=11 // pred_check_branch
          %246 = sbr.rel (%p244) target = $region16
        $region15: #{tpu_custom_call.1} parent=11 // pred_region
          %s248 = ssub.s32 2048, 2048
          %249 = vsyncadd [#allocation9], %s248
          %s250 = sshll.u32 [#allocation8], 4
          %s251 = int_to_ptr.vmem [resolvable:$true] %s250
          %256 = dma.hbm_to_vmem [thread:$0]  %s3, 2048, %s251, [#allocation9], 128, 128, 8
        $region16: #{tpu_custom_call.1} parent=11 // pred_fallthru
          _
        // Predicated region
        $region17: #{tpu_custom_call.1} parent=11 // pred_check
          %p257 = pneg %p173
        $region18: #{tpu_custom_call.1} parent=11 // pred_check_branch
          %259 = sbr.rel (%p257) target = $region20
        $region19: #{tpu_custom_call.1} parent=11 // pred_region
          _
        $region20: #{tpu_custom_call.1} parent=11 // pred_fallthru
          _
      $region12: #{tpu_custom_call.1} parent=5 // pred_fallthru
        _
      %p260 = scmp.lt.s32.totalorder %s26, 2
      // Predicated region
      $region21: #{tpu_custom_call.1} parent=5 // pred_check
        %p261 = pneg %p260
      $region22: #{tpu_custom_call.1} parent=5 // pred_check_branch
        %263 = sbr.rel (%p261) target = $region24
      $region23: #{tpu_custom_call.1} parent=5 // pred_region
        // Predicated region
        $region25: #{tpu_custom_call.1} parent=23 // pred_check
          %p264 = pneg %p67
        $region26: #{tpu_custom_call.1} parent=23 // pred_check_branch
          %266 = sbr.rel (%p264) target = $region28
        $region27: #{tpu_custom_call.1} parent=23 // pred_region
          %s267 = sand.u32 %s57, 1
          %s268 = scalar_lea.sflag [#allocation3], %s267
          %s269 = sand.u32 %s57, 1
          %s270 = smul.addr %s269, 16
          %s271 = scalar_lea.vmem [#allocation2], %s270
          %s272 = smul.u32 2, %s35
          %s274 = ssub.s32 256, 256
          %275 = vsyncadd %s268, %s274
          %s276 = smul.addr %s33, 2
          %s277 = sadd.s32 %s272, %s276
          %s278 = smul.addr %s277, 128
          %s279 = scalar_lea.hbm %s0, %s278
          %s280 = sshll.u32 %s271, 4
          %s281 = int_to_ptr.vmem [resolvable:$true] %s280
          %286 = dma.hbm_to_vmem [thread:$0]  %s279, 256, %s281, %s268, 128, 128, 8
        $region28: #{tpu_custom_call.1} parent=23 // pred_fallthru
          _
        // Predicated region
        $region29: #{tpu_custom_call.1} parent=23 // pred_check
          %p287 = pneg %p95
        $region30: #{tpu_custom_call.1} parent=23 // pred_check_branch
          %289 = sbr.rel (%p287) target = $region32
        $region31: #{tpu_custom_call.1} parent=23 // pred_region
          %s290 = sand.u32 %s26, 1
          %s291 = scalar_lea.sflag [#allocation6], %s290
          %s292 = sand.u32 %s85, 1
          %s293 = smul.addr %s292, 16
          %s294 = scalar_lea.vmem [#allocation5], %s293
          %s295 = smul.u32 2, %s34
          %s297 = ssub.s32 256, 256
          %298 = vsyncadd %s291, %s297
          %s299 = smul.addr %s33, 2
          %s300 = sadd.s32 %s295, %s299
          %s301 = smul.addr %s300, 128
          %s302 = scalar_lea.hbm %s1, %s301
          %s303 = sshll.u32 %s294, 4
          %s304 = int_to_ptr.vmem [resolvable:$true] %s303
          %309 = dma.hbm_to_vmem [thread:$0]  %s302, 256, %s304, %s291, 128, 128, 8
        $region32: #{tpu_custom_call.1} parent=23 // pred_fallthru
          _
        // Predicated region
        $region33: #{tpu_custom_call.1} parent=23 // pred_check
          %p310 = pneg %p125
        $region34: #{tpu_custom_call.1} parent=23 // pred_check_branch
          %312 = sbr.rel (%p310) target = $region36
        $region35: #{tpu_custom_call.1} parent=23 // pred_region
          %s313 = sand.u32 %s26, 1
          %s314 = scalar_lea.sflag [#allocation6], %s313
          %s315 = sand.u32 %s115, 1
          %s316 = smul.addr %s315, 16
          %s317 = scalar_lea.vmem [#allocation7], %s316
          %s318 = smul.u32 2, %s34
          %s320 = ssub.s32 256, 256
          %321 = vsyncadd %s314, %s320
          %s322 = sadd.s32 %s35, %s318
          %s323 = smul.addr %s33, 2
          %s324 = sadd.s32 %s322, %s323
          %s325 = smul.addr %s324, 128
          %s326 = scalar_lea.hbm %s2, %s325
          %s327 = sshll.u32 %s317, 4
          %s328 = int_to_ptr.vmem [resolvable:$true] %s327
          %333 = dma.hbm_to_vmem [thread:$0]  %s326, 256, %s328, %s314, 128, 128, 8
        $region36: #{tpu_custom_call.1} parent=23 // pred_fallthru
          _
      $region24: #{tpu_custom_call.1} parent=5 // pred_fallthru
        _
      %p334 = scmp.le.s32.totalorder 1, %s26
      %p335 = scmp.lt.s32.totalorder %s26, 3
      %p336 = pnand %p334, %p335
      %p337 = pneg %p336
      // Predicated region
      $region37: #{tpu_custom_call.1} parent=5 // pred_check
        _
      $region38: #{tpu_custom_call.1} parent=5 // pred_check_branch
        %339 = sbr.rel (%p336) target = $region40
      $region39: #{tpu_custom_call.1} parent=5 // pred_region
        %s340 = ssub.s32 %s26, 1
        %s341 = sand.u32 %s60, 1
        %s342 = scalar_lea.sflag [#allocation3], %s341
        %s343 = sand.u32 %s60, 1
        %s344 = smul.addr %s343, 16
        %s345 = scalar_lea.vmem [#allocation2], %s344
        // Predicated region
        $region41: #{tpu_custom_call.1} parent=39 // pred_check
          %p346 = pneg %p73
        $region42: #{tpu_custom_call.1} parent=39 // pred_check_branch
          %348 = sbr.rel (%p346) target = $region44
        $region43: #{tpu_custom_call.1} parent=39 // pred_region
          %349 = dma.done %s342, 256
        $region44: #{tpu_custom_call.1} parent=39 // pred_fallthru
          _
        %s350 = sand.u32 %s31, 1
        %s351 = scalar_lea.sflag [#allocation6], %s350
        %s352 = sand.u32 %s88, 1
        %s353 = smul.addr %s352, 16
        %s354 = scalar_lea.vmem [#allocation5], %s353
        // Predicated region
        $region45: #{tpu_custom_call.1} parent=39 // pred_check
          %p355 = pneg %p101
        $region46: #{tpu_custom_call.1} parent=39 // pred_check_branch
          %357 = sbr.rel (%p355) target = $region48
        $region47: #{tpu_custom_call.1} parent=39 // pred_region
          %358 = dma.done %s351, 256
        $region48: #{tpu_custom_call.1} parent=39 // pred_fallthru
          _
        %s359 = sand.u32 %s31, 1
        %s360 = scalar_lea.sflag [#allocation6], %s359
        %s361 = sand.u32 %s118, 1
        %s362 = smul.addr %s361, 16
        %s363 = scalar_lea.vmem [#allocation7], %s362
        // Predicated region
        $region49: #{tpu_custom_call.1} parent=39 // pred_check
          %p364 = pneg %p131
        $region50: #{tpu_custom_call.1} parent=39 // pred_check_branch
          %366 = sbr.rel (%p364) target = $region52
        $region51: #{tpu_custom_call.1} parent=39 // pred_region
          %367 = dma.done %s360, 256
        $region52: #{tpu_custom_call.1} parent=39 // pred_fallthru
          _
        // Predicated region
        $region53: #{tpu_custom_call.1} parent=39 // pred_check
          %p368 = pneg %p152
        $region54: #{tpu_custom_call.1} parent=39 // pred_check_branch
          %370 = sbr.rel (%p368) target = $region56
        $region55: #{tpu_custom_call.1} parent=39 // pred_region
          %371 = dma.done [#allocation9], 2048
        $region56: #{tpu_custom_call.1} parent=39 // pred_fallthru
          _
        %s372 = sand.u32 %s60, 1
        %s373 = scalar_lea.sflag [#allocation3], %s372
        %s374 = sand.u32 %s60, 1
        %s375 = smul.addr %s374, 16
        %s376 = scalar_lea.vmem [#allocation2], %s375
        %p377 = pneg %p73
        %p378 = pneg %p70
        %s379 = sand.u32 %s31, 1
        %s380 = scalar_lea.sflag [#allocation6], %s379
        %s381 = sand.u32 %s88, 1
        %s382 = smul.addr %s381, 16
        %s383 = scalar_lea.vmem [#allocation5], %s382
        %p384 = pneg %p101
        %p385 = pneg %p98
        %s386 = sand.u32 %s31, 1
        %s387 = scalar_lea.sflag [#allocation6], %s386
        %s388 = sand.u32 %s118, 1
        %s389 = smul.addr %s388, 16
        %s390 = scalar_lea.vmem [#allocation7], %s389
        %p391 = pneg %p131
        %p392 = pneg %p128
        %p393 = pneg %p152
        %p394 = pneg %p149
        %p395 = pneg %p173
        %p396 = pneg %p170
        %p397 = pneg %p201
        %p398 = pneg %p198
        %s399 = sand.u32 %s188, 1
        %s400 = scalar_lea.sflag [#allocation4], %s399
        %s401 = sand.u32 %s188, 1
        %s402 = smul.addr %s401, 16
        %s403 = scalar_lea.vmem [#allocation10], %s402
        %p404 = pneg %p229
        %p405 = pneg %p226
        %s406 = sand.u32 %s216, 1
        %s407 = scalar_lea.sflag [#allocation12], %s406
        %s408 = sand.u32 %s216, 1
        %s409 = scalar_lea.vmem [#allocation11], %s408
        %s410 = smul.u32 2, %s38
        %s411 = smul.u32 2, %s37
        %s412 = smul.u32 2, %s37
        %s413 = smul.u32 2, %s37
        %p414 = scmp.eq.s32.totalorder %s38, 0
        // Predicated region
        $region57: #{tpu_custom_call.1} parent=39 // pred_check
          %p415 = pneg %p414
        $region58: #{tpu_custom_call.1} parent=39 // pred_check_branch
          %417 = sbr.rel (%p415) target = $region60
        $region59: #{tpu_custom_call.1} parent=39 // pred_region
          %418 = vst [vmem:[%s403] sm:$0xff] 0.0
          %419 = vst [vmem:[%s403 + $0x8] sm:$0xff] 0.0
        $region60: #{tpu_custom_call.1} parent=39 // pred_fallthru
          _
        %v420 = vld [vmem:[%s363] sm:$0xff]
        %v421 = vld [vmem:[%s363 + $0x8] sm:$0xff]
        %v422 = vld [vmem:[%s345] sm:$0xff]
        %v423 = vld [vmem:[%s345 + $0x8] sm:$0xff]
        %v424 = vld [vmem:[%s403] sm:$0xff]
        %v425 = vld [vmem:[%s403 + $0x8] sm:$0xff]
        %vm426 = vcmask 130048
        %v428 = vsel %vm426, %v420, 0
        %v431 = vsel %vm426, %v421, 0
        %433 = vmatprep.subr.mxu0 0.0
        %434 = vmatpush1.msra.mxu0 %v422
        %435 = vmatprep.subr.mxu0 0.0
        %436 = vmatpush1.msra.mxu0 %v423
        %437 = vmatprep.subr.mxu0 0.0
        %438 = vmatpush1.msra.mxu0 0.0
        %439 = vmatprep.subr.mxu0 0.0
        %440 = vmatpush1.msra.mxu0 0.0
        %441 = vmatprep.subr.mxu0 0.0
        %442 = vmatpush1.msra.mxu0 0.0
        %443 = vmatprep.subr.mxu0 0.0
        %444 = vmatpush1.msra.mxu0 0.0
        %445 = vmatprep.subr.mxu0 0.0
        %446 = vmatpush1.msra.mxu0 0.0
        %447 = vmatprep.subr.mxu0 0.0
        %448 = vmatpush1.msra.mxu0 0.0
        %449 = vmatprep.subr.mxu0 0.0
        %450 = vmatpush1.msra.mxu0 0.0
        %451 = vmatprep.subr.mxu0 0.0
        %452 = vmatpush1.msra.mxu0 0.0
        %453 = vmatprep.subr.mxu0 0.0
        %454 = vmatpush1.msra.mxu0 0.0
        %455 = vmatprep.subr.mxu0 0.0
        %456 = vmatpush1.msra.mxu0 0.0
        %457 = vmatprep.subr.mxu0 0.0
        %458 = vmatpush1.msra.mxu0 0.0
        %459 = vmatprep.subr.mxu0 0.0
        %460 = vmatpush1.msra.mxu0 0.0
        %461 = vmatprep.subr.mxu0 0.0
        %462 = vmatpush1.msra.mxu0 0.0
        %463 = vmatprep.subr.mxu0 0.0
        %464 = vmatpush1.msra.mxu0 0.0
        %465 = vmatprep.subr.mxu0 0.0
        %466 = vmatpush1.msra.mxu0 0.0
        %467 = vmatprep.subr.mxu0 0.0
        %468 = vmatpush1.msra.mxu0 0.0
        %469 = vmatprep.subr.mxu0 0.0
        %470 = vmatpush1.msra.mxu0 0.0
        %471 = vmatprep.subr.mxu0 0.0
        %472 = vmatpush1.msra.mxu0 0.0
        %473 = vmatprep.subr.mxu0 0.0
        %474 = vmatpush1.msra.mxu0 0.0
        %475 = vmatprep.subr.mxu0 0.0
        %476 = vmatpush1.msra.mxu0 0.0
        %477 = vmatprep.subr.mxu0 0.0
        %478 = vmatpush1.msra.mxu0 0.0
        %479 = vmatprep.subr.mxu0 0.0
        %480 = vmatpush1.msra.mxu0 0.0
        %481 = vmatprep.subr.mxu0 0.0
        %482 = vmatpush1.msra.mxu0 0.0
        %483 = vmatprep.subr.mxu0 0.0
        %484 = vmatpush1.msra.mxu0 0.0
        %485 = vmatprep.subr.mxu0 0.0
        %486 = vmatpush1.msra.mxu0 0.0
        %487 = vmatprep.subr.mxu0 0.0
        %488 = vmatpush1.msra.mxu0 0.0
        %489 = vmatprep.subr.mxu0 0.0
        %490 = vmatpush1.msra.mxu0 0.0
        %491 = vmatprep.subr.mxu0 0.0
        %492 = vmatpush1.msra.mxu0 0.0
        %493 = vmatprep.subr.mxu0 0.0
        %494 = vmatpush1.msra.mxu0 0.0
        %495 = vmatprep.subr.mxu0 0.0
        %496 = vmatpush1.msra.mxu0 0.0
        %497 = vmatprep.mubr.f32.mxu0 0.0
        %498 = vmatmul.mubr.f32.gmra.mrb[0].mxu0 %v428
        %v499 = vpop.f32.mrb[0].mxu0
        %v500 = vadd.f32 0.0, %v499
        %v501 = vpop.f32.mrb[0].mxu0
        %502 = vmatprep.mubr.f32.mxu0 0.0
        %503 = vmatmul.mubr.f32.gmra.mrb[0].mxu0 %v431
        %v504 = vpop.f32.mrb[0].mxu0
        %v505 = vadd.f32 0.0, %v504
        %v506 = vpop.f32.mrb[0].mxu0
        %507 = vdwg.mxu0
        %v508 = vadd.f32 %v424, %v500
        %v509 = vadd.f32 %v425, %v505
        %510 = vst [vmem:[%s403] sm:$0xff] %v508
        %511 = vst [vmem:[%s403 + $0x8] sm:$0xff] %v509
        // Predicated region
        $region61: #{tpu_custom_call.1} parent=39 // pred_check
          %p512 = pneg %p414
        $region62: #{tpu_custom_call.1} parent=39 // pred_check_branch
          %514 = sbr.rel (%p512) target = $region64
        $region63: #{tpu_custom_call.1} parent=39 // pred_region
          %v515 = vld [vmem:[%s403] sm:$0xff]
          %v516 = vld [vmem:[%s403 + $0x8] sm:$0xff]
          %v517 = vld [vmem:[#allocation8] sm:$0xff]
          %v518 = vld [vmem:[#allocation8 + $0x8] sm:$0xff]
          %v519 = vld [vmem:[#allocation8 + $0x10] sm:$0xff]
          %v520 = vld [vmem:[#allocation8 + $0x18] sm:$0xff]
          %v521 = vld [vmem:[#allocation8 + $0x20] sm:$0xff]
          %v522 = vld [vmem:[#allocation8 + $0x28] sm:$0xff]
          %v523 = vld [vmem:[#allocation8 + $0x30] sm:$0xff]
          %v524 = vld [vmem:[#allocation8 + $0x38] sm:$0xff]
          %v525 = vld [vmem:[#allocation8 + $0x40] sm:$0xff]
          %v526 = vld [vmem:[#allocation8 + $0x48] sm:$0xff]
          %v527 = vld [vmem:[#allocation8 + $0x50] sm:$0xff]
          %v528 = vld [vmem:[#allocation8 + $0x58] sm:$0xff]
          %v529 = vld [vmem:[#allocation8 + $0x60] sm:$0xff]
          %v530 = vld [vmem:[#allocation8 + $0x68] sm:$0xff]
          %v531 = vld [vmem:[#allocation8 + $0x70] sm:$0xff]
          %v532 = vld [vmem:[#allocation8 + $0x78] sm:$0xff]
          %v533 = vld [vmem:[%s4] sm:$0x1]
          %v535 = vlaneseq
          %v536 = vshrl.u32 %v535, 7
          %v537 = vsub.s32 0, %v536
          %v538 = vrot.slane %v533, %v537
          %540 = vmatprep.subr.mxu0 0.0
          %541 = vmatpush1.msra.mxu0 %v517
          %542 = vmatprep.subr.mxu0 0.0
          %543 = vmatpush1.msra.mxu0 %v518
          %544 = vmatprep.subr.mxu0 0.0
          %545 = vmatpush1.msra.mxu0 %v519
          %546 = vmatprep.subr.mxu0 0.0
          %547 = vmatpush1.msra.mxu0 %v520
          %548 = vmatprep.subr.mxu0 0.0
          %549 = vmatpush1.msra.mxu0 %v521
          %550 = vmatprep.subr.mxu0 0.0
          %551 = vmatpush1.msra.mxu0 %v522
          %552 = vmatprep.subr.mxu0 0.0
          %553 = vmatpush1.msra.mxu0 %v523
          %554 = vmatprep.subr.mxu0 0.0
          %555 = vmatpush1.msra.mxu0 %v524
          %556 = vmatprep.subr.mxu0 0.0
          %557 = vmatpush1.msra.mxu0 %v525
          %558 = vmatprep.subr.mxu0 0.0
          %559 = vmatpush1.msra.mxu0 %v526
          %560 = vmatprep.subr.mxu0 0.0
          %561 = vmatpush1.msra.mxu0 %v527
          %562 = vmatprep.subr.mxu0 0.0
          %563 = vmatpush1.msra.mxu0 %v528
          %564 = vmatprep.subr.mxu0 0.0
          %565 = vmatpush1.msra.mxu0 %v529
          %566 = vmatprep.subr.mxu0 0.0
          %567 = vmatpush1.msra.mxu0 %v530
          %568 = vmatprep.subr.mxu0 0.0
          %569 = vmatpush1.msra.mxu0 %v531
          %570 = vmatprep.subr.mxu0 0.0
          %571 = vmatpush1.msra.mxu0 %v532
          %572 = vmatprep.subr.mxu0 0.0
          %573 = vmatpush1.msra.mxu0 0.0
          %574 = vmatprep.subr.mxu0 0.0
          %575 = vmatpush1.msra.mxu0 0.0
          %576 = vmatprep.subr.mxu0 0.0
          %577 = vmatpush1.msra.mxu0 0.0
          %578 = vmatprep.subr.mxu0 0.0
          %579 = vmatpush1.msra.mxu0 0.0
          %580 = vmatprep.subr.mxu0 0.0
          %581 = vmatpush1.msra.mxu0 0.0
          %582 = vmatprep.subr.mxu0 0.0
          %583 = vmatpush1.msra.mxu0 0.0
          %584 = vmatprep.subr.mxu0 0.0
          %585 = vmatpush1.msra.mxu0 0.0
          %586 = vmatprep.subr.mxu0 0.0
          %587 = vmatpush1.msra.mxu0 0.0
          %588 = vmatprep.subr.mxu0 0.0
          %589 = vmatpush1.msra.mxu0 0.0
          %590 = vmatprep.subr.mxu0 0.0
          %591 = vmatpush1.msra.mxu0 0.0
          %592 = vmatprep.subr.mxu0 0.0
          %593 = vmatpush1.msra.mxu0 0.0
          %594 = vmatprep.subr.mxu0 0.0
          %595 = vmatpush1.msra.mxu0 0.0
          %596 = vmatprep.subr.mxu0 0.0
          %597 = vmatpush1.msra.mxu0 0.0
          %598 = vmatprep.subr.mxu0 0.0
          %599 = vmatpush1.msra.mxu0 0.0
          %600 = vmatprep.subr.mxu0 0.0
          %601 = vmatpush1.msra.mxu0 0.0
          %602 = vmatprep.subr.mxu0 0.0
          %603 = vmatpush1.msra.mxu0 0.0
          %604 = vmatprep.mubr.f32.mxu0 0.0
          %605 = vmatmul.mubr.f32.gmra.mrb[0].mxu0 %v515
          %v606 = vpop.f32.mrb[0].mxu0
          %v607 = vadd.f32 %v538, %v606
          %v608 = vpop.f32.mrb[0].mxu0
          %609 = vmatprep.mubr.f32.mxu0 0.0
          %610 = vmatmul.mubr.f32.gmra.mrb[0].mxu0 %v516
          %v611 = vpop.f32.mrb[0].mxu0
          %v612 = vadd.f32 %v538, %v611
          %v613 = vpop.f32.mrb[0].mxu0
          %614 = vdwg.mxu0
          %615 = vst [vmem:[%s403] sm:$0xff] %v607
          %616 = vst [vmem:[%s403 + $0x8] sm:$0xff] %v612
          %v617 = vld [vmem:[%s354] sm:$0xff]
          %v618 = vld [vmem:[%s354 + $0x8] sm:$0xff]
          %v619 = vmul.f32 %v607, %v617
          %v620 = vmul.f32 %v612, %v618
          %621 = vxpose.xlu0.b32.start [1/16] %v619, 128
          %622 = vxpose.xlu0.b32.cont [2/16] %v620, 128
          %623 = vxpose.xlu0.b32.cont [3/16] 0.0, 128
          %624 = vxpose.xlu0.b32.cont [4/16] 0.0, 128
          %625 = vxpose.xlu0.b32.cont [5/16] 0.0, 128
          %626 = vxpose.xlu0.b32.cont [6/16] 0.0, 128
          %627 = vxpose.xlu0.b32.cont [7/16] 0.0, 128
          %628 = vxpose.xlu0.b32.cont [8/16] 0.0, 128
          %629 = vxpose.xlu0.b32.cont [9/16] 0.0, 128
          %630 = vxpose.xlu0.b32.cont [10/16] 0.0, 128
          %631 = vxpose.xlu0.b32.cont [11/16] 0.0, 128
          %632 = vxpose.xlu0.b32.cont [12/16] 0.0, 128
          %633 = vxpose.xlu0.b32.cont [13/16] 0.0, 128
          %634 = vxpose.xlu0.b32.cont [14/16] 0.0, 128
          %635 = vxpose.xlu0.b32.cont [15/16] 0.0, 128
          %636 = vxpose.xlu0.b32.end [16/16] 0.0, 128
          %v637 = vpop.trf.xlu0
          %v638 = vpop.trf.xlu0
          %v639 = vpop.trf.xlu0
          %v640 = vpop.trf.xlu0
          %v641 = vpop.trf.xlu0
          %v642 = vpop.trf.xlu0
          %v643 = vpop.trf.xlu0
          %v644 = vpop.trf.xlu0
          %v645 = vpop.trf.xlu0
          %v646 = vpop.trf.xlu0
          %v647 = vpop.trf.xlu0
          %v648 = vpop.trf.xlu0
          %v649 = vpop.trf.xlu0
          %v650 = vpop.trf.xlu0
          %v651 = vpop.trf.xlu0
          %v652 = vpop.trf.xlu0
          %v653 = vsel %vm426, %v637, 0.0
          %v654 = vsel %vm426, %v638, 0.0
          %v655 = vadd.f32 %v653, %v654
          %v656 = vsel %vm426, %v639, 0.0
          %v657 = vadd.f32 %v655, %v656
          %v658 = vsel %vm426, %v640, 0.0
          %v659 = vadd.f32 %v657, %v658
          %v660 = vsel %vm426, %v641, 0.0
          %v661 = vadd.f32 %v659, %v660
          %v662 = vsel %vm426, %v642, 0.0
          %v663 = vadd.f32 %v661, %v662
          %v664 = vsel %vm426, %v643, 0.0
          %v665 = vadd.f32 %v663, %v664
          %v666 = vsel %vm426, %v644, 0.0
          %v667 = vadd.f32 %v665, %v666
          %v668 = vsel %vm426, %v645, 0.0
          %v669 = vadd.f32 %v667, %v668
          %v670 = vsel %vm426, %v646, 0.0
          %v671 = vadd.f32 %v669, %v670
          %v672 = vsel %vm426, %v647, 0.0
          %v673 = vadd.f32 %v671, %v672
          %v674 = vsel %vm426, %v648, 0.0
          %v675 = vadd.f32 %v673, %v674
          %v676 = vsel %vm426, %v649, 0.0
          %v677 = vadd.f32 %v675, %v676
          %v678 = vsel %vm426, %v650, 0.0
          %v679 = vadd.f32 %v677, %v678
          %v680 = vsel %vm426, %v651, 0.0
          %v681 = vadd.f32 %v679, %v680
          %v682 = vsel %vm426, %v652, 0.0
          %v683 = vadd.f32 %v681, %v682
          %v684 = vrot.slane %v683, 4
          %v685 = vadd.f32 %v683, %v684
          %v686 = vrot.slane %v685, 2
          %v687 = vadd.f32 %v685, %v686
          %v688 = vrot.slane %v687, 1
          %v689 = vadd.f32 %v687, %v688
          %v690 = vsub.f32 0.0, %v689
          %v691 = vmax.f32 %v690, 0.0
          %v692 = vand.u32 2147483647, %v689
          %v693 = vsub.f32 0.0, %v692
          %v694 = vmul.f32 %v693, 1.442695
          %v695 = vpow.pop %v694
          %v696 = vadd.f32 %v695, 1.0
          %v697 = vlog2.pop %v696
          %v698 = vmul.f32 %v697, 0.6931472
          %v699 = vmul.f32 -0.5, %v695
          %v700 = vadd.f32 %v699, 1.0
          %v701 = vmul.f32 %v700, %v695
          %v702 = vand.u32 2147483647, %v695
          %vm703 = vcmp.lt.f32.partialorder %v702, 0.0004427343
          %v704 = vsel %vm703, %v701, %v698
          %v705 = vadd.f32 %v691, %v704
          %vm706 = vcmask 122880
          %707 = vst.msk [vmem:[%s409] sm:$0x1] %vm706, %v705
        $region64: #{tpu_custom_call.1} parent=39 // pred_fallthru
          _
        %s708 = sand.u32 %s188, 1
        %s709 = scalar_lea.sflag [#allocation4], %s708
        %s710 = sand.u32 %s188, 1
        %s711 = smul.addr %s710, 16
        %s712 = scalar_lea.vmem [#allocation10], %s711
        %s713 = sand.u32 %s216, 1
        %s714 = scalar_lea.sflag [#allocation12], %s713
        %s715 = sand.u32 %s216, 1
        %s716 = scalar_lea.vmem [#allocation11], %s715
        // Predicated region
        $region65: #{tpu_custom_call.1} parent=39 // pred_check
          %p717 = pneg %p198
        $region66: #{tpu_custom_call.1} parent=39 // pred_check_branch
          %719 = sbr.rel (%p717) target = $region68
        $region67: #{tpu_custom_call.1} parent=39 // pred_region
          %s720 = smul.u32 2, %s37
          %s722 = ssub.s32 256, 256
          %723 = vsyncadd %s709, %s722
          %s724 = smul.addr %s36, 2
          %s725 = sadd.s32 %s720, %s724
          %s726 = smul.addr %s725, 128
          %s727 = scalar_lea.hbm %s5, %s726
          %s728 = sshll.u32 %s712, 4
          %s729 = int_to_ptr.vmem [resolvable:$true] %s728
          %734 = dma.vmem_to_hbm [thread:$0]  %s729, 256, %s727, %s709, 128, 128, 8
        $region68: #{tpu_custom_call.1} parent=39 // pred_fallthru
          _
        // Predicated region
        $region69: #{tpu_custom_call.1} parent=39 // pred_check
          %p735 = pneg %p226
        $region70: #{tpu_custom_call.1} parent=39 // pred_check_branch
          %737 = sbr.rel (%p735) target = $region72
        $region71: #{tpu_custom_call.1} parent=39 // pred_region
          %s739 = ssub.s32 16, 16
          %740 = vsyncadd %s714, %s739
          %s741 = sadd.s32 %s37, %s36
          %s742 = smul.addr %s741, 16
          %s743 = scalar_lea.hbm %s6, %s742
          %s745 = sshll.u32 %s716, 4
          %s746 = int_to_ptr.vmem [resolvable:$true] %s745
          %748 = dma.vmem_to_hbm [thread:$0]  %s746, 16, %s743, %s714
        $region72: #{tpu_custom_call.1} parent=39 // pred_fallthru
          _
      $region40: #{tpu_custom_call.1} parent=5 // pred_fallthru
        _
      %p749 = scmp.le.s32.totalorder 2, %s26
      // Predicated region
      $region73: #{tpu_custom_call.1} parent=5 // pred_check
        %p750 = pneg %p749
      $region74: #{tpu_custom_call.1} parent=5 // pred_check_branch
        %752 = sbr.rel (%p750) target = $region76
      $region75: #{tpu_custom_call.1} parent=5 // pred_region
        %s753 = ssub.s32 %s26, 2
        // Predicated region
        $region77: #{tpu_custom_call.1} parent=75 // pred_check
          %p754 = pneg %p204
        $region78: #{tpu_custom_call.1} parent=75 // pred_check_branch
          %756 = sbr.rel (%p754) target = $region80
        $region79: #{tpu_custom_call.1} parent=75 // pred_region
          %s757 = sand.u32 %s189, 1
          %s758 = scalar_lea.sflag [#allocation4], %s757
          %s759 = sand.u32 %s189, 1
          %s760 = smul.addr %s759, 16
          %s761 = scalar_lea.vmem [#allocation10], %s760
          %762 = dma.done %s758, 256
        $region80: #{tpu_custom_call.1} parent=75 // pred_fallthru
          _
        // Predicated region
        $region81: #{tpu_custom_call.1} parent=75 // pred_check
          %p763 = pneg %p232
        $region82: #{tpu_custom_call.1} parent=75 // pred_check_branch
          %765 = sbr.rel (%p763) target = $region84
        $region83: #{tpu_custom_call.1} parent=75 // pred_region
          %s766 = sand.u32 %s217, 1
          %s767 = scalar_lea.sflag [#allocation12], %s766
          %s768 = sand.u32 %s217, 1
          %s769 = scalar_lea.vmem [#allocation11], %s768
          %770 = dma.done %s767, 16
        $region84: #{tpu_custom_call.1} parent=75 // pred_fallthru
          _
      $region76: #{tpu_custom_call.1} parent=5 // pred_fallthru
        _
    $region6: #{tpu_custom_call.1} parent=1 // loop_footer
      %s30 = sadd.s32 1, %s26
    $region7: #{tpu_custom_call.1} parent=1 // loop_footer_branch
      %25 = sbr.rel target = $region3
    $region8: #{tpu_custom_call.1} parent=1 // loop_exit
      _
    %771 = vsyncpa [#allocation3], 1
    %s772 = scalar_lea.sflag [#allocation3], 1
    %773 = vsyncpa %s772, 1
    %774 = vsyncpa [#allocation6], 1
    %s775 = scalar_lea.sflag [#allocation6], 1
    %776 = vsyncpa %s775, 1
    %777 = vsyncpa [#allocation9], 1
    %778 = vsyncpa [#allocation4], 1
    %s779 = scalar_lea.sflag [#allocation4], 1
    %780 = vsyncpa %s779, 1
    %781 = vsyncpa [#allocation12], 1
    %s782 = scalar_lea.sflag [#allocation12], 1
    %783 = vsyncpa %s782, 1

</llo_original>
